<compile_context>
chip_gen: v5e
topology: v5e:2x2
jax: 0.10.0
libtpu: 0.0.40
codegen_flags: <defaults>
</compile_context>

<pallas_src>
import math
import functools

import jax
import jax.numpy as jnp
from jax import lax
from jax.experimental import pallas as pl
from jax.experimental.pallas import tpu as pltpu


def _attn_kernel(x_ref, wkvq_ref, bkvq_ref, wp_ref, bp_ref, mask_ref,
                 y_ref, kv_ref, *, n_head, bb, mxu_dtype):
    _, T, C = x_ref.shape
    hd = C // n_head
    scale = 1.0 / math.sqrt(hd)

    # ---- fused packed projection:  (bb*T, C) @ (C, 3C) -> [K | V | Q] ------
    x = x_ref[...].reshape(bb * T, C).astype(mxu_dtype)
    w = wkvq_ref[...].astype(mxu_dtype)
    kvq = jnp.dot(x, w, preferred_element_type=jnp.float32) + bkvq_ref[0]

    # present (K, V) written as one lane-dense 2C-wide slab (unmasked stores).
    kv_ref[...] = kvq[:, :2 * C].reshape(bb, T, 2 * C).astype(kv_ref.dtype)

    mask_bias = mask_ref[...]                       # (T, T), 0 or -1e30, f32

    # ---- per-(batch, head) attention from static lane slices ---------------
    y_rows = []
    for b in range(bb):
        r0 = b * T
        parts = []
        for h in range(n_head):
            kh = kvq[r0:r0 + T, h * hd:(h + 1) * hd]               # (T, hd)
            vh = kvq[r0:r0 + T, C + h * hd:C + (h + 1) * hd]       # (T, hd)
            qh = kvq[r0:r0 + T, 2 * C + h * hd:2 * C + (h + 1) * hd]

            # q @ k^T without an explicit transpose (contract last dims).
            att = lax.dot_general(
                qh.astype(mxu_dtype), kh.astype(mxu_dtype),
                (((1,), (1,)), ((), ())),
                preferred_element_type=jnp.float32) * scale        # (T, T)
            att = att + mask_bias

            att_max = jnp.max(att, axis=-1, keepdims=True)
            p = jnp.exp(att - att_max)
            denom = jnp.sum(p, axis=-1, keepdims=True)
            p = p * pl.reciprocal(denom, approx=True)

            parts.append(jnp.dot(p.astype(mxu_dtype), vh.astype(mxu_dtype),
                                 preferred_element_type=jnp.float32))
        y_rows.append(jnp.concatenate(parts, axis=-1))             # (T, C)
    y_att = y_rows[0] if bb == 1 else jnp.concatenate(y_rows, axis=0)

    # ---- output projection --------------------------------------------------
    out = jnp.dot(y_att.astype(mxu_dtype), wp_ref[...].astype(mxu_dtype),
                  preferred_element_type=jnp.float32) + bp_ref[0]
    y_ref[...] = out.reshape(bb, T, C).astype(y_ref.dtype)


def causal_self_attention(x, params, *, n_head, causal=True,
                          mxu_dtype=jnp.float32, batch_block=None):
    """x: (B, T, C).  Returns (y, present) matching the torch module."""
    B, T, C = x.shape
    hd = C // n_head
    wq, bq, wk, bk, wv, bv, wp, bp = params

    # Pack as [K | V | Q] so 'present' is the leading 2C (=128) lanes.
    w_kvq = jnp.concatenate([wk, wv, wq], axis=1)               # (C, 3C)
    b_kvq = jnp.concatenate([bk, bv, bq]).reshape(1, 3 * C)     # (1, 3C)
    bp2 = bp.reshape(1, C)

    if causal:
        row = jnp.arange(T)[:, None]
        col = jnp.arange(T)[None, :]
        mask_bias = jnp.where(row >= col, 0.0, -1e30).astype(jnp.float32)
    else:
        mask_bias = jnp.zeros((T, T), jnp.float32)

    # Fold batches per grid step but keep >= 2 parallel steps when possible
    # (v7x has 2 TensorCores); for B=2 this is bb=1, grid=(2,).
    if batch_block is None:
        batch_block = B // 2 if (B >= 2 and B % 2 == 0) else 1
    bb = batch_block
    assert B % bb == 0, "batch_block must divide B"
    grid = (B // bb,)

    kernel = functools.partial(_attn_kernel, n_head=n_head, bb=bb,
                               mxu_dtype=mxu_dtype)
    const2 = lambda i: (0, 0)

    y, kv = pl.pallas_call(
        kernel,
        out_shape=(
            jax.ShapeDtypeStruct((B, T, C), x.dtype),
            jax.ShapeDtypeStruct((B, T, 2 * C), x.dtype),
        ),
        grid_spec=pltpu.PrefetchScalarGridSpec(
            num_scalar_prefetch=0,
            grid=grid,
            in_specs=[
                pl.BlockSpec((bb, T, C), lambda i: (i, 0, 0)),   # x
                pl.BlockSpec((C, 3 * C), const2),                # packed W
                pl.BlockSpec((1, 3 * C), const2),                # packed b
                pl.BlockSpec((C, C), const2),                    # W_proj
                pl.BlockSpec((1, C), const2),                    # b_proj
                pl.BlockSpec((T, T), const2),                    # mask bias
            ],
            out_specs=[
                pl.BlockSpec((bb, T, C), lambda i: (i, 0, 0)),        # y
                pl.BlockSpec((bb, T, 2 * C), lambda i: (i, 0, 0)),    # [K|V]
            ],
        ),
        compiler_params=pltpu.CompilerParams(
            dimension_semantics=("parallel",)),
    )(x, w_kvq, b_kvq, wp, bp2, mask_bias)

    # (B, T, 2C) -> (2, B, n_head, T, hd); cheap wrapper-side relayout,
    # replaces the old jnp.stack HBM round-trip.
    present = jnp.transpose(kv.reshape(B, T, 2, n_head, hd), (2, 0, 3, 1, 4))
    return y, present


def _reference(x, params, *, n_head, causal=True):
    """Pure-JAX reference mirroring the PyTorch forward."""
    B, T, C = x.shape
    hd = C // n_head
    wq, bq, wk, bk, wv, bv, wp, bp = params
    q = (x @ wq + bq).reshape(B, T, n_head, hd).transpose(0, 2, 1, 3)
    k = (x @ wk + bk).reshape(B, T, n_head, hd).transpose(0, 2, 1, 3)
    v = (x @ wv + bv).reshape(B, T, n_head, hd).transpose(0, 2, 1, 3)
    att = jnp.einsum('bhtd,bhsd->bhts', q, k) * (1.0 / math.sqrt(hd))
    if causal:
        mask = jnp.tril(jnp.ones((T, T), bool))
        att = jnp.where(mask[None, None], att, -jnp.inf)
    att = jax.nn.softmax(att, axis=-1)
    y = jnp.einsum('bhts,bhsd->bhtd', att, v)
    y = y.transpose(0, 2, 1, 3).reshape(B, T, C)
    y = y @ wp + bp
    return y, jnp.stack((k, v))


if __name__ == "__main__":
    # Small config consistent with the module:
    #   H.bert_n_emb = 64, H.bert_n_head = 4, T = prod(latent_shape) = 16,
    #   H.sampler = 'autoregressive' -> causal mask, pdrop = 0.
    B, T, C, n_head = 2, 16, 64, 4

    key = jax.random.PRNGKey(0)
    ks = jax.random.split(key, 9)
    init = lambda k, shape: (0.02 * jax.random.normal(k, shape)).astype(jnp.float32)

    params = (
        init(ks[0], (C, C)), init(ks[1], (C,)),   # query
        init(ks[2], (C, C)), init(ks[3], (C,)),   # key
        init(ks[4], (C, C)), init(ks[5], (C,)),   # value
        init(ks[6], (C, C)), init(ks[7], (C,)),   # proj
    )
    x = jax.random.normal(ks[8], (B, T, C), dtype=jnp.float32)

    y_ref, present_ref = _reference(x, params, n_head=n_head, causal=True)

    # f32 MXU path (default; safest for v5e) -------------------------------
    y, present = causal_self_attention(x, params, n_head=n_head, causal=True)
    jax.block_until_ready((y, present))
    assert y.shape == (B, T, C)
    assert present.shape == (2, B, n_head, T, C // n_head)
    assert jnp.allclose(y, y_ref, atol=5e-4, rtol=5e-3)
    assert jnp.allclose(present, present_ref, atol=5e-4, rtol=5e-3)

    # bf16 MXU path (v6e / v7x fast path; f32 accumulation & softmax) -------
    y_bf, present_bf = causal_self_attention(
        x, params, n_head=n_head, causal=True, mxu_dtype=jnp.bfloat16)
    jax.block_until_ready((y_bf, present_bf))
    assert jnp.allclose(y_bf, y_ref, atol=2e-2, rtol=5e-2)
    assert jnp.allclose(present_bf, present_ref, atol=2e-2, rtol=5e-2)

    print("KERNEL_OK")
</pallas_src>

<mosaic_0001>
module attributes {stable_mosaic.version = 11 : i64} {
  func.func @_attn_kernel(%arg0: i32, %arg1: memref<1x16x64xf32, #tpu.memory_space<vmem>>, %arg2: memref<64x192xf32, #tpu.memory_space<vmem>>, %arg3: memref<1x192xf32, #tpu.memory_space<vmem>>, %arg4: memref<64x64xf32, #tpu.memory_space<vmem>>, %arg5: memref<1x64xf32, #tpu.memory_space<vmem>>, %arg6: memref<16x16xf32, #tpu.memory_space<vmem>>, %arg7: memref<1x16x64xf32, #tpu.memory_space<vmem>>, %arg8: memref<1x16x128xf32, #tpu.memory_space<vmem>>) attributes {dimension_semantics = [#tpu.dimension_semantics<parallel>], iteration_bounds = array<i64: 2>, scalar_prefetch = 0 : i64, scratch_operands = 0 : i64, tpu.core_type = #tpu.core_type<tc>, window_params = [{transform_indices = @transform_0, window_bounds = array<i64: 1, 16, 64>}, {pipeline_mode = #tpu.pipeline_mode<synchronous>, transform_indices = @transform_1, window_bounds = array<i64: 64, 192>}, {pipeline_mode = #tpu.pipeline_mode<synchronous>, transform_indices = @transform_2, window_bounds = array<i64: 1, 192>}, {pipeline_mode = #tpu.pipeline_mode<synchronous>, transform_indices = @transform_3, window_bounds = array<i64: 64, 64>}, {pipeline_mode = #tpu.pipeline_mode<synchronous>, transform_indices = @transform_4, window_bounds = array<i64: 1, 64>}, {pipeline_mode = #tpu.pipeline_mode<synchronous>, transform_indices = @transform_5, window_bounds = array<i64: 16, 16>}, {transform_indices = @transform_6, window_bounds = array<i64: 1, 16, 64>}, {transform_indices = @transform_7, window_bounds = array<i64: 1, 16, 128>}]} {
    %c0 = arith.constant 0 : index
    %c0_0 = arith.constant 0 : index
    %c0_1 = arith.constant 0 : index
    %0 = vector.load %arg1[%c0, %c0_0, %c0_1] : memref<1x16x64xf32, #tpu.memory_space<vmem>>, vector<1x16x64xf32>
    %1 = vector.shape_cast %0 : vector<1x16x64xf32> to vector<16x64xf32>
    %c0_2 = arith.constant 0 : index
    %c0_3 = arith.constant 0 : index
    %2 = vector.load %arg2[%c0_2, %c0_3] : memref<64x192xf32, #tpu.memory_space<vmem>>, vector<64x192xf32>
    %cst = arith.constant dense<0.000000e+00> : vector<16x192xf32>
    %3 = tpu.matmul %1, %2, %cst {dimension_numbers = #tpu.dot_dimension_numbers<[1], [0], [0], [1], [0, 0, 1, 1], [], []>} : vector<16x64xf32>, vector<64x192xf32>, vector<16x192xf32> -> vector<16x192xf32>
    %c0_4 = arith.constant 0 : index
    %c0_5 = arith.constant 0 : index
    %4 = vector.load %arg3[%c0_4, %c0_5] : memref<1x192xf32, #tpu.memory_space<vmem>>, vector<1x192xf32>
    %5 = vector.shape_cast %4 : vector<1x192xf32> to vector<192xf32>
    %6 = vector.shape_cast %5 : vector<192xf32> to vector<1x192xf32>
    %7 = vector.broadcast %6 : vector<1x192xf32> to vector<16x192xf32>
    %8 = arith.addf %3, %7 : vector<16x192xf32>
    %9 = vector.extract_strided_slice %8 {offsets = [0, 0], sizes = [16, 128], strides = [1, 1]} : vector<16x192xf32> to vector<16x128xf32>
    %10 = vector.shape_cast %9 : vector<16x128xf32> to vector<1x16x128xf32>
    %c0_6 = arith.constant 0 : index
    %c0_7 = arith.constant 0 : index
    %c0_8 = arith.constant 0 : index
    %11 = vector.load %arg8[%c0_6, %c0_7, %c0_8] : memref<1x16x128xf32, #tpu.memory_space<vmem>>, vector<1x16x128xf32>
    tpu.vector_store %arg8[%c0_6, %c0_7, %c0_8], %10 {strides = array<i32>} : memref<1x16x128xf32, #tpu.memory_space<vmem>>, vector<1x16x128xf32>,
    %c0_9 = arith.constant 0 : index
    %c0_10 = arith.constant 0 : index
    %12 = vector.load %arg6[%c0_9, %c0_10] : memref<16x16xf32, #tpu.memory_space<vmem>>, vector<16x16xf32>
    %13 = vector.extract_strided_slice %8 {offsets = [0, 0], sizes = [16, 16], strides = [1, 1]} : vector<16x192xf32> to vector<16x16xf32>
    %14 = vector.extract_strided_slice %8 {offsets = [0, 64], sizes = [16, 16], strides = [1, 1]} : vector<16x192xf32> to vector<16x16xf32>
    %15 = vector.extract_strided_slice %8 {offsets = [0, 128], sizes = [16, 16], strides = [1, 1]} : vector<16x192xf32> to vector<16x16xf32>
    %cst_11 = arith.constant dense<0.000000e+00> : vector<16x16xf32>
    %16 = tpu.matmul %15, %13, %cst_11 {dimension_numbers = #tpu.dot_dimension_numbers<[1], [1], [0], [0], [0, 0, 1, 0], [], []>} : vector<16x16xf32>, vector<16x16xf32>, vector<16x16xf32> -> vector<16x16xf32>
    %cst_12 = arith.constant 2.500000e-01 : f32
    %17 = vector.broadcast %cst_12 : f32 to vector<16x16xf32>
    %18 = arith.mulf %16, %17 : vector<16x16xf32>
    %19 = arith.addf %18, %12 : vector<16x16xf32>
    %cst_13 = arith.constant dense<0xFF800000> : vector<16xf32>
    %20 = vector.multi_reduction <maximumf>, %19, %cst_13 [1] : vector<16x16xf32> to vector<16xf32>
    %21 = vector.shape_cast %20 : vector<16xf32> to vector<16x1xf32>
    %22 = vector.broadcast %21 : vector<16x1xf32> to vector<16x16xf32>
    %23 = arith.subf %19, %22 : vector<16x16xf32>
    %24 = math.exp %23 : vector<16x16xf32>
    %cst_14 = arith.constant dense<0.000000e+00> : vector<16xf32>
    %25 = vector.multi_reduction <add>, %24, %cst_14 [1] : vector<16x16xf32> to vector<16xf32>
    %26 = vector.shape_cast %25 : vector<16xf32> to vector<16x1xf32>
    %27 = tpu.reciprocal %26 {approx = true} : vector<16x1xf32> -> vector<16x1xf32>
    %28 = vector.broadcast %27 : vector<16x1xf32> to vector<16x16xf32>
    %29 = arith.mulf %24, %28 : vector<16x16xf32>
    %cst_15 = arith.constant dense<0.000000e+00> : vector<16x16xf32>
    %30 = tpu.matmul %29, %14, %cst_15 {dimension_numbers = #tpu.dot_dimension_numbers<[1], [0], [0], [1], [0, 0, 1, 1], [], []>} : vector<16x16xf32>, vector<16x16xf32>, vector<16x16xf32> -> vector<16x16xf32>
    %31 = vector.extract_strided_slice %8 {offsets = [0, 16], sizes = [16, 16], strides = [1, 1]} : vector<16x192xf32> to vector<16x16xf32>
    %32 = vector.extract_strided_slice %8 {offsets = [0, 80], sizes = [16, 16], strides = [1, 1]} : vector<16x192xf32> to vector<16x16xf32>
    %33 = vector.extract_strided_slice %8 {offsets = [0, 144], sizes = [16, 16], strides = [1, 1]} : vector<16x192xf32> to vector<16x16xf32>
    %cst_16 = arith.constant dense<0.000000e+00> : vector<16x16xf32>
    %34 = tpu.matmul %33, %31, %cst_16 {dimension_numbers = #tpu.dot_dimension_numbers<[1], [1], [0], [0], [0, 0, 1, 0], [], []>} : vector<16x16xf32>, vector<16x16xf32>, vector<16x16xf32> -> vector<16x16xf32>
    %cst_17 = arith.constant 2.500000e-01 : f32
    %35 = vector.broadcast %cst_17 : f32 to vector<16x16xf32>
    %36 = arith.mulf %34, %35 : vector<16x16xf32>
    %37 = arith.addf %36, %12 : vector<16x16xf32>
    %cst_18 = arith.constant dense<0xFF800000> : vector<16xf32>
    %38 = vector.multi_reduction <maximumf>, %37, %cst_18 [1] : vector<16x16xf32> to vector<16xf32>
    %39 = vector.shape_cast %38 : vector<16xf32> to vector<16x1xf32>
    %40 = vector.broadcast %39 : vector<16x1xf32> to vector<16x16xf32>
    %41 = arith.subf %37, %40 : vector<16x16xf32>
    %42 = math.exp %41 : vector<16x16xf32>
    %cst_19 = arith.constant dense<0.000000e+00> : vector<16xf32>
    %43 = vector.multi_reduction <add>, %42, %cst_19 [1] : vector<16x16xf32> to vector<16xf32>
    %44 = vector.shape_cast %43 : vector<16xf32> to vector<16x1xf32>
    %45 = tpu.reciprocal %44 {approx = true} : vector<16x1xf32> -> vector<16x1xf32>
    %46 = vector.broadcast %45 : vector<16x1xf32> to vector<16x16xf32>
    %47 = arith.mulf %42, %46 : vector<16x16xf32>
    %cst_20 = arith.constant dense<0.000000e+00> : vector<16x16xf32>
    %48 = tpu.matmul %47, %32, %cst_20 {dimension_numbers = #tpu.dot_dimension_numbers<[1], [0], [0], [1], [0, 0, 1, 1], [], []>} : vector<16x16xf32>, vector<16x16xf32>, vector<16x16xf32> -> vector<16x16xf32>
    %49 = vector.extract_strided_slice %8 {offsets = [0, 32], sizes = [16, 16], strides = [1, 1]} : vector<16x192xf32> to vector<16x16xf32>
    %50 = vector.extract_strided_slice %8 {offsets = [0, 96], sizes = [16, 16], strides = [1, 1]} : vector<16x192xf32> to vector<16x16xf32>
    %51 = vector.extract_strided_slice %8 {offsets = [0, 160], sizes = [16, 16], strides = [1, 1]} : vector<16x192xf32> to vector<16x16xf32>
    %cst_21 = arith.constant dense<0.000000e+00> : vector<16x16xf32>
    %52 = tpu.matmul %51, %49, %cst_21 {dimension_numbers = #tpu.dot_dimension_numbers<[1], [1], [0], [0], [0, 0, 1, 0], [], []>} : vector<16x16xf32>, vector<16x16xf32>, vector<16x16xf32> -> vector<16x16xf32>
    %cst_22 = arith.constant 2.500000e-01 : f32
    %53 = vector.broadcast %cst_22 : f32 to vector<16x16xf32>
    %54 = arith.mulf %52, %53 : vector<16x16xf32>
    %55 = arith.addf %54, %12 : vector<16x16xf32>
    %cst_23 = arith.constant dense<0xFF800000> : vector<16xf32>
    %56 = vector.multi_reduction <maximumf>, %55, %cst_23 [1] : vector<16x16xf32> to vector<16xf32>
    %57 = vector.shape_cast %56 : vector<16xf32> to vector<16x1xf32>
    %58 = vector.broadcast %57 : vector<16x1xf32> to vector<16x16xf32>
    %59 = arith.subf %55, %58 : vector<16x16xf32>
    %60 = math.exp %59 : vector<16x16xf32>
    %cst_24 = arith.constant dense<0.000000e+00> : vector<16xf32>
    %61 = vector.multi_reduction <add>, %60, %cst_24 [1] : vector<16x16xf32> to vector<16xf32>
    %62 = vector.shape_cast %61 : vector<16xf32> to vector<16x1xf32>
    %63 = tpu.reciprocal %62 {approx = true} : vector<16x1xf32> -> vector<16x1xf32>
    %64 = vector.broadcast %63 : vector<16x1xf32> to vector<16x16xf32>
    %65 = arith.mulf %60, %64 : vector<16x16xf32>
    %cst_25 = arith.constant dense<0.000000e+00> : vector<16x16xf32>
    %66 = tpu.matmul %65, %50, %cst_25 {dimension_numbers = #tpu.dot_dimension_numbers<[1], [0], [0], [1], [0, 0, 1, 1], [], []>} : vector<16x16xf32>, vector<16x16xf32>, vector<16x16xf32> -> vector<16x16xf32>
    %67 = vector.extract_strided_slice %8 {offsets = [0, 48], sizes = [16, 16], strides = [1, 1]} : vector<16x192xf32> to vector<16x16xf32>
    %68 = vector.extract_strided_slice %8 {offsets = [0, 112], sizes = [16, 16], strides = [1, 1]} : vector<16x192xf32> to vector<16x16xf32>
    %69 = vector.extract_strided_slice %8 {offsets = [0, 176], sizes = [16, 16], strides = [1, 1]} : vector<16x192xf32> to vector<16x16xf32>
    %cst_26 = arith.constant dense<0.000000e+00> : vector<16x16xf32>
    %70 = tpu.matmul %69, %67, %cst_26 {dimension_numbers = #tpu.dot_dimension_numbers<[1], [1], [0], [0], [0, 0, 1, 0], [], []>} : vector<16x16xf32>, vector<16x16xf32>, vector<16x16xf32> -> vector<16x16xf32>
    %cst_27 = arith.constant 2.500000e-01 : f32
    %71 = vector.broadcast %cst_27 : f32 to vector<16x16xf32>
    %72 = arith.mulf %70, %71 : vector<16x16xf32>
    %73 = arith.addf %72, %12 : vector<16x16xf32>
    %cst_28 = arith.constant dense<0xFF800000> : vector<16xf32>
    %74 = vector.multi_reduction <maximumf>, %73, %cst_28 [1] : vector<16x16xf32> to vector<16xf32>
    %75 = vector.shape_cast %74 : vector<16xf32> to vector<16x1xf32>
    %76 = vector.broadcast %75 : vector<16x1xf32> to vector<16x16xf32>
    %77 = arith.subf %73, %76 : vector<16x16xf32>
    %78 = math.exp %77 : vector<16x16xf32>
    %cst_29 = arith.constant dense<0.000000e+00> : vector<16xf32>
    %79 = vector.multi_reduction <add>, %78, %cst_29 [1] : vector<16x16xf32> to vector<16xf32>
    %80 = vector.shape_cast %79 : vector<16xf32> to vector<16x1xf32>
    %81 = tpu.reciprocal %80 {approx = true} : vector<16x1xf32> -> vector<16x1xf32>
    %82 = vector.broadcast %81 : vector<16x1xf32> to vector<16x16xf32>
    %83 = arith.mulf %78, %82 : vector<16x16xf32>
    %cst_30 = arith.constant dense<0.000000e+00> : vector<16x16xf32>
    %84 = tpu.matmul %83, %68, %cst_30 {dimension_numbers = #tpu.dot_dimension_numbers<[1], [0], [0], [1], [0, 0, 1, 1], [], []>} : vector<16x16xf32>, vector<16x16xf32>, vector<16x16xf32> -> vector<16x16xf32>
    %85 = tpu.concatenate %30, %48, %66, %84 in 1 : vector<16x16xf32>, vector<16x16xf32>, vector<16x16xf32>, vector<16x16xf32> -> vector<16x64xf32>
    %c0_31 = arith.constant 0 : index
    %c0_32 = arith.constant 0 : index
    %86 = vector.load %arg4[%c0_31, %c0_32] : memref<64x64xf32, #tpu.memory_space<vmem>>, vector<64x64xf32>
    %cst_33 = arith.constant dense<0.000000e+00> : vector<16x64xf32>
    %87 = tpu.matmul %85, %86, %cst_33 {dimension_numbers = #tpu.dot_dimension_numbers<[1], [0], [0], [1], [0, 0, 1, 1], [], []>} : vector<16x64xf32>, vector<64x64xf32>, vector<16x64xf32> -> vector<16x64xf32>
    %c0_34 = arith.constant 0 : index
    %c0_35 = arith.constant 0 : index
    %88 = vector.load %arg5[%c0_34, %c0_35] : memref<1x64xf32, #tpu.memory_space<vmem>>, vector<1x64xf32>
    %89 = vector.shape_cast %88 : vector<1x64xf32> to vector<64xf32>
    %90 = vector.shape_cast %89 : vector<64xf32> to vector<1x64xf32>
    %91 = vector.broadcast %90 : vector<1x64xf32> to vector<16x64xf32>
    %92 = arith.addf %87, %91 : vector<16x64xf32>
    %93 = vector.shape_cast %92 : vector<16x64xf32> to vector<1x16x64xf32>
    %c0_36 = arith.constant 0 : index
    %c0_37 = arith.constant 0 : index
    %c0_38 = arith.constant 0 : index
    %94 = vector.load %arg7[%c0_36, %c0_37, %c0_38] : memref<1x16x64xf32, #tpu.memory_space<vmem>>, vector<1x16x64xf32>
    tpu.vector_store %arg7[%c0_36, %c0_37, %c0_38], %93 {strides = array<i32>} : memref<1x16x64xf32, #tpu.memory_space<vmem>>, vector<1x16x64xf32>,
    return
  }
  func.func @transform_0(%arg0: i32) -> (i32, i32, i32) {
    %c0_i32 = arith.constant 0 : i32
    %c0_i32_0 = arith.constant 0 : i32
    %c0_i32_1 = arith.constant 0 : i32
    return %arg0, %c0_i32, %c0_i32_0 : i32, i32, i32
  }
  func.func @transform_1(%arg0: i32) -> (i32, i32) {
    %c0_i32 = arith.constant 0 : i32
    %c0_i32_0 = arith.constant 0 : i32
    %c0_i32_1 = arith.constant 0 : i32
    return %c0_i32, %c0_i32_0 : i32, i32
  }
  func.func @transform_2(%arg0: i32) -> (i32, i32) {
    %c0_i32 = arith.constant 0 : i32
    %c0_i32_0 = arith.constant 0 : i32
    %c0_i32_1 = arith.constant 0 : i32
    return %c0_i32, %c0_i32_0 : i32, i32
  }
  func.func @transform_3(%arg0: i32) -> (i32, i32) {
    %c0_i32 = arith.constant 0 : i32
    %c0_i32_0 = arith.constant 0 : i32
    %c0_i32_1 = arith.constant 0 : i32
    return %c0_i32, %c0_i32_0 : i32, i32
  }
  func.func @transform_4(%arg0: i32) -> (i32, i32) {
    %c0_i32 = arith.constant 0 : i32
    %c0_i32_0 = arith.constant 0 : i32
    %c0_i32_1 = arith.constant 0 : i32
    return %c0_i32, %c0_i32_0 : i32, i32
  }
  func.func @transform_5(%arg0: i32) -> (i32, i32) {
    %c0_i32 = arith.constant 0 : i32
    %c0_i32_0 = arith.constant 0 : i32
    %c0_i32_1 = arith.constant 0 : i32
    return %c0_i32, %c0_i32_0 : i32, i32
  }
  func.func @transform_6(%arg0: i32) -> (i32, i32, i32) {
    %c0_i32 = arith.constant 0 : i32
    %c0_i32_0 = arith.constant 0 : i32
    %c0_i32_1 = arith.constant 0 : i32
    return %arg0, %c0_i32, %c0_i32_0 : i32, i32, i32
  }
  func.func @transform_7(%arg0: i32) -> (i32, i32, i32) {
    %c0_i32 = arith.constant 0 : i32
    %c0_i32_0 = arith.constant 0 : i32
    %c0_i32_1 = arith.constant 0 : i32
    return %arg0, %c0_i32, %c0_i32_0 : i32, i32, i32
  }
}

</mosaic_0001>

<llo_original>
// kernel: tpu_custom_call.1
$region0: #{tpu_custom_call.1}
  #allocation0 [shape = 'u32[]', space=smem, size = 0x4, offset = 0x4, fixed_abs, tag = 'smem constant byte address 0x4 - core index']
  #allocation1 [shape = 'u32[72,128]{1,0:T(1,128)}', space=vmem, size = 0x9000, scoped, tag = 'internal scratch']
  %s0 = inlined_call_operand.hbm [shape: f32[2,16,64], index: 0, kind: input, shape index: {}]
  %s1 = inlined_call_operand.hbm [shape: f32[64,192], index: 1, kind: input, shape index: {}]
  %s2 = inlined_call_operand.hbm [shape: f32[1,192], index: 2, kind: input, shape index: {}]
  %s3 = inlined_call_operand.hbm [shape: f32[64,64], index: 3, kind: input, shape index: {}]
  %s4 = inlined_call_operand.vmem [shape: f32[1,64], index: 4, kind: input, shape index: {}]
  %s5 = inlined_call_operand.hbm [shape: f32[16,16], index: 5, kind: input, shape index: {}]
  %s6 = inlined_call_operand.hbm [shape: f32[2,16,64], index: 6, kind: output, shape index: {0}]
  %s7 = inlined_call_operand.hbm [shape: f32[2,16,128], index: 7, kind: output, shape index: {1}]
  %8 = xla_tuple %s6, %s7
  %s9 = sld [smem:[#allocation0]]
  $region85: #{tpu_custom_call.1} parent=0
    _
  %s11 = ssub.s32 1, %s9
  %s12 = scalar_select 0, %s11, %s9
  $region1: #{tpu_custom_call.1} parent=0
    #allocation2 [shape = 'u8[16384]{0}', space=vmem, size = 0x4000, scoped, tag = 'input window, operand 0']
    #allocation3 [shape = 's32[2]{0}', space=sflag, size = 0x8, scoped, tag = 'scoped memory for tpu_custom_call.1']
    #allocation4 [shape = 's32[2]{0}', space=sflag, size = 0x8, scoped, tag = 'scoped memory for tpu_custom_call.1']
    #allocation5 [shape = 'u8[65536]{0}', space=vmem, size = 0x10000, scoped, tag = 'input window, operand 1, single buffered']
    #allocation6 [shape = 's32[1]{0}', space=sflag, size = 0x4, scoped, tag = 'scoped memory for tpu_custom_call.1']
    #allocation7 [shape = 'u8[1024]{0}', space=vmem, size = 0x400, scoped, tag = 'input window, operand 2, single buffered']
    #allocation8 [shape = 'u8[32768]{0}', space=vmem, size = 0x8000, scoped, tag = 'input window, operand 3, single buffered']
    #allocation9 [shape = 's32[1]{0}', space=sflag, size = 0x4, scoped, tag = 'scoped memory for tpu_custom_call.1']
    #allocation10 [shape = 'u8[8192]{0}', space=vmem, size = 0x2000, scoped, tag = 'input window, operand 5, single buffered']
    #allocation11 [shape = 'u8[16384]{0}', space=vmem, size = 0x4000, scoped, tag = 'output window, operand 0']
    #allocation12 [shape = 'u8[16384]{0}', space=vmem, size = 0x4000, scoped, tag = 'output window, operand 1']
    #allocation13 [shape = 's32[2]{0}', space=sflag, size = 0x8, scoped, tag = 'scoped memory for tpu_custom_call.1']
    %13 = vsyncpa [#allocation3], 0
    %s14 = scalar_lea.sflag [#allocation3], 1
    %15 = vsyncpa %s14, 0
    %16 = vsyncpa [#allocation6], 0
    %17 = vsyncpa [#allocation9], 0
    %18 = vsyncpa [#allocation4], 0
    %s19 = scalar_lea.sflag [#allocation4], 1
    %20 = vsyncpa %s19, 0
    %21 = vsyncpa [#allocation13], 0
    %s22 = scalar_lea.sflag [#allocation13], 1
    %23 = vsyncpa %s22, 0
    loop: start=0, step=1, limit=4
    $region2: #{tpu_custom_call.1} parent=1 // loop_pre_header
      _
    $region3: #{tpu_custom_call.1} parent=1 // loop_header
      %s25 = sphi 0, %s29
      %p26 = scmp.ge.s32.totalorder %s25, 4
      %s35 = sphi 0, %s37
      %s38 = sphi 0, %s35
      %s39 = sphi 0, %s38
      %s55 = sphi 0, %s39
      %s59 = sphi 0, %s59
      %s61 = sphi 0, %s59
      %s62 = sphi 0, %s61
      %s76 = sphi 0, %s62
      %s80 = sphi 0, %s80
      %s82 = sphi 0, %s80
      %s83 = sphi 0, %s82
      %s97 = sphi 0, %s83
      %s101 = sphi 0, %s101
      %s103 = sphi 0, %s101
      %s104 = sphi 0, %s103
      %s118 = sphi 0, %s104
      %s122 = sphi 0, %s122
      %s124 = sphi 0, %s122
      %s125 = sphi 0, %s124
      %s139 = sphi 0, %s125
      %s143 = sphi 0, %s143
      %s145 = sphi 0, %s143
      %s146 = sphi 0, %s145
      %s160 = sphi 0, %s146
      %s166 = sphi 0, %s168
      %s169 = sphi 0, %s166
      %s170 = sphi 0, %s169
      %s186 = sphi 0, %s170
      %s192 = sphi 0, %s194
      %s195 = sphi 0, %s192
      %s196 = sphi 0, %s195
      %s212 = sphi 0, %s196
    $region4: #{tpu_custom_call.1} parent=1 // loop_header_branch
      %28 = sbr.rel (%p26) target = $region8
    $region5: #{tpu_custom_call.1} parent=1 // loop_body
      %s30 = ssub.s32 %s25, 1
      %s31 = ssub.s32 %s25, 2
      %s32 = sadd.s32 %s25, 1
      %s33 = ssub.s32 %s25, %s32
      %p34 = scmp.eq.s32.totalorder %s33, 0
      %s36 = sadd.s32 %s35, 1
      %s37 = scalar_select %p34, %s35, %s36
      %p40 = pneg %p34
      %p41 = scmp.eq.s32.totalorder %s25, 1
      %p42 = por %p40, %p41
      %p43 = scmp.ne.s32.totalorder %s35, %s38
      %p44 = scmp.eq.s32.totalorder %s25, 0
      %p45 = por %p43, %p44
      %p46 = scmp.ne.s32.totalorder %s35, %s38
      %p47 = scmp.eq.s32.totalorder %s30, 1
      %p48 = por %p46, %p47
      %p49 = scmp.ne.s32.totalorder %s38, %s39
      %p50 = scmp.eq.s32.totalorder %s30, 0
      %p51 = por %p49, %p50
      %p52 = scmp.ne.s32.totalorder %s38, %s39
      %p53 = scmp.eq.s32.totalorder %s31, 1
      %p54 = por %p52, %p53
      %p56 = scmp.ne.s32.totalorder %s39, %s55
      %p57 = scmp.eq.s32.totalorder %s31, 0
      %p58 = por %p56, %p57
      %s60 = sadd.s32 %s59, 1
      %p63 = scmp.eq.s32.totalorder %s25, 1
      %p64 = scmp.ne.s32.totalorder %s59, %s61
      %p65 = scmp.eq.s32.totalorder %s25, 0
      %p66 = por %p64, %p65
      %p67 = scmp.ne.s32.totalorder %s59, %s61
      %p68 = scmp.eq.s32.totalorder %s30, 1
      %p69 = por %p67, %p68
      %p70 = scmp.ne.s32.totalorder %s61, %s62
      %p71 = scmp.eq.s32.totalorder %s30, 0
      %p72 = por %p70, %p71
      %p73 = scmp.ne.s32.totalorder %s61, %s62
      %p74 = scmp.eq.s32.totalorder %s31, 1
      %p75 = por %p73, %p74
      %p77 = scmp.ne.s32.totalorder %s62, %s76
      %p78 = scmp.eq.s32.totalorder %s31, 0
      %p79 = por %p77, %p78
      %s81 = sadd.s32 %s80, 1
      %p84 = scmp.eq.s32.totalorder %s25, 1
      %p85 = scmp.ne.s32.totalorder %s80, %s82
      %p86 = scmp.eq.s32.totalorder %s25, 0
      %p87 = por %p85, %p86
      %p88 = scmp.ne.s32.totalorder %s80, %s82
      %p89 = scmp.eq.s32.totalorder %s30, 1
      %p90 = por %p88, %p89
      %p91 = scmp.ne.s32.totalorder %s82, %s83
      %p92 = scmp.eq.s32.totalorder %s30, 0
      %p93 = por %p91, %p92
      %p94 = scmp.ne.s32.totalorder %s82, %s83
      %p95 = scmp.eq.s32.totalorder %s31, 1
      %p96 = por %p94, %p95
      %p98 = scmp.ne.s32.totalorder %s83, %s97
      %p99 = scmp.eq.s32.totalorder %s31, 0
      %p100 = por %p98, %p99
      %s102 = sadd.s32 %s101, 1
      %p105 = scmp.eq.s32.totalorder %s25, 1
      %p106 = scmp.ne.s32.totalorder %s101, %s103
      %p107 = scmp.eq.s32.totalorder %s25, 0
      %p108 = por %p106, %p107
      %p109 = scmp.ne.s32.totalorder %s101, %s103
      %p110 = scmp.eq.s32.totalorder %s30, 1
      %p111 = por %p109, %p110
      %p112 = scmp.ne.s32.totalorder %s103, %s104
      %p113 = scmp.eq.s32.totalorder %s30, 0
      %p114 = por %p112, %p113
      %p115 = scmp.ne.s32.totalorder %s103, %s104
      %p116 = scmp.eq.s32.totalorder %s31, 1
      %p117 = por %p115, %p116
      %p119 = scmp.ne.s32.totalorder %s104, %s118
      %p120 = scmp.eq.s32.totalorder %s31, 0
      %p121 = por %p119, %p120
      %s123 = sadd.s32 %s122, 1
      %p126 = scmp.eq.s32.totalorder %s25, 1
      %p127 = scmp.ne.s32.totalorder %s122, %s124
      %p128 = scmp.eq.s32.totalorder %s25, 0
      %p129 = por %p127, %p128
      %p130 = scmp.ne.s32.totalorder %s122, %s124
      %p131 = scmp.eq.s32.totalorder %s30, 1
      %p132 = por %p130, %p131
      %p133 = scmp.ne.s32.totalorder %s124, %s125
      %p134 = scmp.eq.s32.totalorder %s30, 0
      %p135 = por %p133, %p134
      %p136 = scmp.ne.s32.totalorder %s124, %s125
      %p137 = scmp.eq.s32.totalorder %s31, 1
      %p138 = por %p136, %p137
      %p140 = scmp.ne.s32.totalorder %s125, %s139
      %p141 = scmp.eq.s32.totalorder %s31, 0
      %p142 = por %p140, %p141
      %s144 = sadd.s32 %s143, 1
      %p147 = scmp.eq.s32.totalorder %s25, 1
      %p148 = scmp.ne.s32.totalorder %s143, %s145
      %p149 = scmp.eq.s32.totalorder %s25, 0
      %p150 = por %p148, %p149
      %p151 = scmp.ne.s32.totalorder %s143, %s145
      %p152 = scmp.eq.s32.totalorder %s30, 1
      %p153 = por %p151, %p152
      %p154 = scmp.ne.s32.totalorder %s145, %s146
      %p155 = scmp.eq.s32.totalorder %s30, 0
      %p156 = por %p154, %p155
      %p157 = scmp.ne.s32.totalorder %s145, %s146
      %p158 = scmp.eq.s32.totalorder %s31, 1
      %p159 = por %p157, %p158
      %p161 = scmp.ne.s32.totalorder %s146, %s160
      %p162 = scmp.eq.s32.totalorder %s31, 0
      %p163 = por %p161, %p162
      %s164 = ssub.s32 %s25, %s32
      %p165 = scmp.eq.s32.totalorder %s164, 0
      %s167 = sadd.s32 %s166, 1
      %s168 = scalar_select %p165, %s166, %s167
      %p171 = pneg %p165
      %p172 = scmp.eq.s32.totalorder %s25, 1
      %p173 = por %p171, %p172
      %p174 = scmp.ne.s32.totalorder %s166, %s169
      %p175 = scmp.eq.s32.totalorder %s25, 0
      %p176 = por %p174, %p175
      %p177 = scmp.ne.s32.totalorder %s166, %s169
      %p178 = scmp.eq.s32.totalorder %s30, 1
      %p179 = por %p177, %p178
      %p180 = scmp.ne.s32.totalorder %s169, %s170
      %p181 = scmp.eq.s32.totalorder %s30, 0
      %p182 = por %p180, %p181
      %p183 = scmp.ne.s32.totalorder %s169, %s170
      %p184 = scmp.eq.s32.totalorder %s31, 1
      %p185 = por %p183, %p184
      %p187 = scmp.ne.s32.totalorder %s170, %s186
      %p188 = scmp.eq.s32.totalorder %s31, 0
      %p189 = por %p187, %p188
      %s190 = ssub.s32 %s25, %s32
      %p191 = scmp.eq.s32.totalorder %s190, 0
      %s193 = sadd.s32 %s192, 1
      %s194 = scalar_select %p191, %s192, %s193
      %p197 = pneg %p191
      %p198 = scmp.eq.s32.totalorder %s25, 1
      %p199 = por %p197, %p198
      %p200 = scmp.ne.s32.totalorder %s192, %s195
      %p201 = scmp.eq.s32.totalorder %s25, 0
      %p202 = por %p200, %p201
      %p203 = scmp.ne.s32.totalorder %s192, %s195
      %p204 = scmp.eq.s32.totalorder %s30, 1
      %p205 = por %p203, %p204
      %p206 = scmp.ne.s32.totalorder %s195, %s196
      %p207 = scmp.eq.s32.totalorder %s30, 0
      %p208 = por %p206, %p207
      %p209 = scmp.ne.s32.totalorder %s195, %s196
      %p210 = scmp.eq.s32.totalorder %s31, 1
      %p211 = por %p209, %p210
      %p213 = scmp.ne.s32.totalorder %s196, %s212
      %p214 = scmp.eq.s32.totalorder %s31, 0
      %p215 = por %p213, %p214
      %p216 = scmp.le.s32.totalorder 1, %s25
      %p217 = scmp.lt.s32.totalorder %s25, 3
      %p218 = pnand %p216, %p217
      %p219 = pneg %p218
      // Predicated region
      $region9: #{tpu_custom_call.1} parent=5 // pred_check
        _
      $region10: #{tpu_custom_call.1} parent=5 // pred_check_branch
        %221 = sbr.rel (%p218) target = $region12
      $region11: #{tpu_custom_call.1} parent=5 // pred_region
        %s222 = ssub.s32 %s25, 1
        // Predicated region
        $region13: #{tpu_custom_call.1} parent=11 // pred_check
          %p223 = pneg %p72
        $region14: #{tpu_custom_call.1} parent=11 // pred_check_branch
          %225 = sbr.rel (%p223) target = $region16
        $region15: #{tpu_custom_call.1} parent=11 // pred_region
          %227 = vsyncadd [#allocation6], 0
          %s228 = sshll.u32 %s1, 4
          %s229 = int_to_ptr.hbm [resolvable:$true] %s228
          %s230 = sshll.u32 [#allocation5], 4
          %s231 = int_to_ptr.vmem [resolvable:$true] %s230
          %236 = dma.hbm_to_vmem [thread:$0]  %s229, 2048, %s231, [#allocation6], 256, 256, 16
        $region16: #{tpu_custom_call.1} parent=11 // pred_fallthru
          _
        // Predicated region
        $region17: #{tpu_custom_call.1} parent=11 // pred_check
          %p237 = pneg %p93
        $region18: #{tpu_custom_call.1} parent=11 // pred_check_branch
          %239 = sbr.rel (%p237) target = $region20
        $region19: #{tpu_custom_call.1} parent=11 // pred_region
          %241 = vsyncadd [#allocation6], 0
          %s243 = sshll.u32 %s2, 4
          %s244 = int_to_ptr.hbm [resolvable:$true] %s243
          %s245 = sshll.u32 [#allocation7], 4
          %s246 = int_to_ptr.vmem [resolvable:$true] %s245
          %248 = dma.hbm_to_vmem [thread:$0]  %s244, 32, %s246, [#allocation6]
        $region20: #{tpu_custom_call.1} parent=11 // pred_fallthru
          _
        // Predicated region
        $region21: #{tpu_custom_call.1} parent=11 // pred_check
          %p249 = pneg %p114
        $region22: #{tpu_custom_call.1} parent=11 // pred_check_branch
          %251 = sbr.rel (%p249) target = $region24
        $region23: #{tpu_custom_call.1} parent=11 // pred_region
          %253 = vsyncadd [#allocation9], 0
          %s254 = sshll.u32 %s3, 4
          %s255 = int_to_ptr.hbm [resolvable:$true] %s254
          %s256 = sshll.u32 [#allocation8], 4
          %s257 = int_to_ptr.vmem [resolvable:$true] %s256
          %262 = dma.hbm_to_vmem [thread:$0]  %s255, 1024, %s257, [#allocation9], 128, 128, 8
        $region24: #{tpu_custom_call.1} parent=11 // pred_fallthru
          _
        // Predicated region
        $region25: #{tpu_custom_call.1} parent=11 // pred_check
          %p263 = pneg %p135
        $region26: #{tpu_custom_call.1} parent=11 // pred_check_branch
          %265 = sbr.rel (%p263) target = $region28
        $region27: #{tpu_custom_call.1} parent=11 // pred_region
          _
        $region28: #{tpu_custom_call.1} parent=11 // pred_fallthru
          _
        // Predicated region
        $region29: #{tpu_custom_call.1} parent=11 // pred_check
          %p266 = pneg %p156
        $region30: #{tpu_custom_call.1} parent=11 // pred_check_branch
          %268 = sbr.rel (%p266) target = $region32
        $region31: #{tpu_custom_call.1} parent=11 // pred_region
          %270 = vsyncadd [#allocation9], 0
          %s271 = sshll.u32 %s5, 4
          %s272 = int_to_ptr.hbm [resolvable:$true] %s271
          %s273 = sshll.u32 [#allocation10], 4
          %s274 = int_to_ptr.vmem [resolvable:$true] %s273
          %279 = dma.hbm_to_vmem [thread:$0]  %s272, 256, %s274, [#allocation9], 128, 128, 8
        $region32: #{tpu_custom_call.1} parent=11 // pred_fallthru
          _
      $region12: #{tpu_custom_call.1} parent=5 // pred_fallthru
        _
      %p280 = scmp.lt.s32.totalorder %s25, 2
      // Predicated region
      $region33: #{tpu_custom_call.1} parent=5 // pred_check
        %p281 = pneg %p280
      $region34: #{tpu_custom_call.1} parent=5 // pred_check_branch
        %283 = sbr.rel (%p281) target = $region36
      $region35: #{tpu_custom_call.1} parent=5 // pred_region
        // Predicated region
        $region37: #{tpu_custom_call.1} parent=35 // pred_check
          %p284 = pneg %p45
        $region38: #{tpu_custom_call.1} parent=35 // pred_check_branch
          %286 = sbr.rel (%p284) target = $region40
        $region39: #{tpu_custom_call.1} parent=35 // pred_region
          %s287 = sand.u32 %s35, 1
          %s288 = scalar_lea.sflag [#allocation3], %s287
          %s289 = sand.u32 %s35, 1
          %s290 = smul.addr %s289, 16
          %s291 = scalar_lea.vmem [#allocation2], %s290
          %293 = vsyncadd %s288, 0
          %s294 = smul.addr %s25, 2
          %s295 = smul.addr %s294, 8
          %s296 = scalar_lea.hbm %s0, %s295
          %s297 = sshll.u32 %s296, 4
          %s298 = int_to_ptr.hbm [resolvable:$true] %s297
          %s299 = sshll.u32 %s291, 4
          %s300 = int_to_ptr.vmem [resolvable:$true] %s299
          %305 = dma.hbm_to_vmem [thread:$0]  %s298, 256, %s300, %s288, 128, 128, 8
        $region40: #{tpu_custom_call.1} parent=35 // pred_fallthru
          _
      $region36: #{tpu_custom_call.1} parent=5 // pred_fallthru
        _
      %p306 = scmp.le.s32.totalorder 1, %s25
      %p307 = scmp.lt.s32.totalorder %s25, 3
      %p308 = pnand %p306, %p307
      %p309 = pneg %p308
      // Predicated region
      $region41: #{tpu_custom_call.1} parent=5 // pred_check
        _
      $region42: #{tpu_custom_call.1} parent=5 // pred_check_branch
        %311 = sbr.rel (%p308) target = $region44
      $region43: #{tpu_custom_call.1} parent=5 // pred_region
        %s312 = ssub.s32 %s25, 1
        %s313 = sand.u32 %s38, 1
        %s314 = scalar_lea.sflag [#allocation3], %s313
        %s315 = sand.u32 %s38, 1
        %s316 = smul.addr %s315, 16
        %s317 = scalar_lea.vmem [#allocation2], %s316
        // Predicated region
        $region45: #{tpu_custom_call.1} parent=43 // pred_check
          %p318 = pneg %p51
        $region46: #{tpu_custom_call.1} parent=43 // pred_check_branch
          %320 = sbr.rel (%p318) target = $region48
        $region47: #{tpu_custom_call.1} parent=43 // pred_region
          %322 = dma.done %s314, 256
        $region48: #{tpu_custom_call.1} parent=43 // pred_fallthru
          _
        // Predicated region
        $region49: #{tpu_custom_call.1} parent=43 // pred_check
          %p323 = pneg %p72
        $region50: #{tpu_custom_call.1} parent=43 // pred_check_branch
          %325 = sbr.rel (%p323) target = $region52
        $region51: #{tpu_custom_call.1} parent=43 // pred_region
          %327 = dma.done [#allocation6], 2048
        $region52: #{tpu_custom_call.1} parent=43 // pred_fallthru
          _
        // Predicated region
        $region53: #{tpu_custom_call.1} parent=43 // pred_check
          %p328 = pneg %p93
        $region54: #{tpu_custom_call.1} parent=43 // pred_check_branch
          %330 = sbr.rel (%p328) target = $region56
        $region55: #{tpu_custom_call.1} parent=43 // pred_region
          %332 = dma.done [#allocation6], 32
        $region56: #{tpu_custom_call.1} parent=43 // pred_fallthru
          _
        // Predicated region
        $region57: #{tpu_custom_call.1} parent=43 // pred_check
          %p333 = pneg %p114
        $region58: #{tpu_custom_call.1} parent=43 // pred_check_branch
          %335 = sbr.rel (%p333) target = $region60
        $region59: #{tpu_custom_call.1} parent=43 // pred_region
          %337 = dma.done [#allocation9], 1024
        $region60: #{tpu_custom_call.1} parent=43 // pred_fallthru
          _
        // Predicated region
        $region61: #{tpu_custom_call.1} parent=43 // pred_check
          %p338 = pneg %p156
        $region62: #{tpu_custom_call.1} parent=43 // pred_check_branch
          %340 = sbr.rel (%p338) target = $region64
        $region63: #{tpu_custom_call.1} parent=43 // pred_region
          %342 = dma.done [#allocation9], 256
        $region64: #{tpu_custom_call.1} parent=43 // pred_fallthru
          _
        %s343 = sand.u32 %s38, 1
        %s344 = scalar_lea.sflag [#allocation3], %s343
        %s345 = sand.u32 %s38, 1
        %s346 = smul.addr %s345, 16
        %s347 = scalar_lea.vmem [#allocation2], %s346
        %p348 = pneg %p51
        %p349 = pneg %p48
        %p350 = pneg %p72
        %p351 = pneg %p69
        %p352 = pneg %p93
        %p353 = pneg %p90
        %p354 = pneg %p114
        %p355 = pneg %p111
        %p356 = pneg %p135
        %p357 = pneg %p132
        %p358 = pneg %p156
        %p359 = pneg %p153
        %p360 = pneg %p182
        %p361 = pneg %p179
        %s362 = sand.u32 %s169, 1
        %s363 = scalar_lea.sflag [#allocation4], %s362
        %s364 = sand.u32 %s169, 1
        %s365 = smul.addr %s364, 16
        %s366 = scalar_lea.vmem [#allocation11], %s365
        %p367 = pneg %p208
        %p368 = pneg %p205
        %s369 = sand.u32 %s195, 1
        %s370 = scalar_lea.sflag [#allocation13], %s369
        %s371 = sand.u32 %s195, 1
        %s372 = smul.addr %s371, 16
        %s373 = scalar_lea.vmem [#allocation12], %s372
        %v374 = vld [vmem:[%s317] sm:$0xff]
        %v375 = vld [vmem:[%s317 + $0x8] sm:$0xff]
        %v376 = vld [vmem:[#allocation5] sm:$0xff]
        %v377 = vld [vmem:[#allocation5 + $0x8] sm:$0xff]
        %v378 = vld [vmem:[#allocation5 + $0x10] sm:$0xff]
        %v379 = vld [vmem:[#allocation5 + $0x18] sm:$0xff]
        %v380 = vld [vmem:[#allocation5 + $0x20] sm:$0xff]
        %v381 = vld [vmem:[#allocation5 + $0x28] sm:$0xff]
        %v382 = vld [vmem:[#allocation5 + $0x30] sm:$0xff]
        %v383 = vld [vmem:[#allocation5 + $0x38] sm:$0xff]
        %v384 = vld [vmem:[#allocation5 + $0x40] sm:$0xff]
        %v385 = vld [vmem:[#allocation5 + $0x48] sm:$0xff]
        %v386 = vld [vmem:[#allocation5 + $0x50] sm:$0xff]
        %v387 = vld [vmem:[#allocation5 + $0x58] sm:$0xff]
        %v388 = vld [vmem:[#allocation5 + $0x60] sm:$0xff]
        %v389 = vld [vmem:[#allocation5 + $0x68] sm:$0xff]
        %v390 = vld [vmem:[#allocation5 + $0x70] sm:$0xff]
        %v391 = vld [vmem:[#allocation5 + $0x78] sm:$0xff]
        %v392 = vld [vmem:[#allocation7] sm:$0x3]
        %v394 = vperm.slane %v392, 0
        %v395 = vperm.slane %v392, 1
        %vm398 = vcmask 523264
        %v400 = vsel %vm398, %v374, 0
        %v403 = vsel %vm398, %v375, 0
        %405 = vmatpush.msra.mxu0 0.0
        %406 = vmatpush.msra.mxu0 0.0
        %407 = vmatpush.msra.mxu0 0.0
        %408 = vmatpush.msra.mxu0 0.0
        %409 = vmatpush.msra.mxu0 0.0
        %410 = vmatpush.msra.mxu0 0.0
        %411 = vmatpush.msra.mxu0 0.0
        %412 = vmatpush.msra.mxu0 0.0
        %413 = vmatpush.msra.mxu0 %v390
        %414 = vmatpush.msra.mxu0 %v388
        %415 = vmatpush.msra.mxu0 %v386
        %416 = vmatpush.msra.mxu0 %v384
        %417 = vmatpush.msra.mxu0 %v382
        %418 = vmatpush.msra.mxu0 %v380
        %419 = vmatpush.msra.mxu0 %v378
        %420 = vmatpush.msra.mxu0 %v376
        %421 = vmatmul.f32.gmra.mxu0 %v400
        %v422 = vpop.f32.mrf.mxu0
        %v423 = vadd.f32 %v394, %v422
        %424 = vmatmul.f32.gmra.mxu0 %v403
        %v425 = vpop.f32.mrf.mxu0
        %v426 = vadd.f32 %v394, %v425
        %427 = vdwg.mxu0
        %428 = vmatpush.msra.mxu0 0.0
        %429 = vmatpush.msra.mxu0 0.0
        %430 = vmatpush.msra.mxu0 0.0
        %431 = vmatpush.msra.mxu0 0.0
        %432 = vmatpush.msra.mxu0 0.0
        %433 = vmatpush.msra.mxu0 0.0
        %434 = vmatpush.msra.mxu0 0.0
        %435 = vmatpush.msra.mxu0 0.0
        %436 = vmatpush.msra.mxu0 %v391
        %437 = vmatpush.msra.mxu0 %v389
        %438 = vmatpush.msra.mxu0 %v387
        %439 = vmatpush.msra.mxu0 %v385
        %440 = vmatpush.msra.mxu0 %v383
        %441 = vmatpush.msra.mxu0 %v381
        %442 = vmatpush.msra.mxu0 %v379
        %443 = vmatpush.msra.mxu0 %v377
        %444 = vmatmul.f32.gmra.mxu0 %v400
        %v445 = vpop.f32.mrf.mxu0
        %v446 = vadd.f32 %v395, %v445
        %447 = vmatmul.f32.gmra.mxu0 %v403
        %v448 = vpop.f32.mrf.mxu0
        %v449 = vadd.f32 %v395, %v448
        %450 = vdwg.mxu0
        %451 = vst [vmem:[%s373] sm:$0xff] %v423
        %452 = vst [vmem:[%s373 + $0x8] sm:$0xff] %v426
        %v453 = vld [vmem:[#allocation10] sm:$0xff]
        %v454 = vld [vmem:[#allocation10 + $0x8] sm:$0xff]
        %vm455 = vcmask 130048
        %v457 = vsel %vm455, %v446, 0
        %v460 = vsel %vm455, %v449, 0
        %v463 = vsel %vm455, %v423, 0
        %v466 = vsel %vm455, %v426, 0
        %468 = vmatpush.xpose.msra.mxu0 0.0
        %469 = vmatpush.xpose.msra.mxu0 0.0
        %470 = vmatpush.xpose.msra.mxu0 0.0
        %471 = vmatpush.xpose.msra.mxu0 0.0
        %472 = vmatpush.xpose.msra.mxu0 0.0
        %473 = vmatpush.xpose.msra.mxu0 0.0
        %474 = vmatpush.xpose.msra.mxu0 0.0
        %475 = vmatpush.xpose.msra.mxu0 0.0
        %476 = vmatpush.xpose.msra.mxu0 0.0
        %477 = vmatpush.xpose.msra.mxu0 0.0
        %478 = vmatpush.xpose.msra.mxu0 0.0
        %479 = vmatpush.xpose.msra.mxu0 0.0
        %480 = vmatpush.xpose.msra.mxu0 0.0
        %481 = vmatpush.xpose.msra.mxu0 0.0
        %482 = vmatpush.xpose.msra.mxu0 %v466
        %483 = vmatpush.xpose.msra.mxu0 %v463
        %484 = vmatmul.f32.gmra.mxu0 %v457
        %v485 = vpop.f32.mrf.mxu0
        %v486 = vadd.f32 0.0, %v485
        %487 = vmatmul.f32.gmra.mxu0 %v460
        %v488 = vpop.f32.mrf.mxu0
        %v489 = vadd.f32 0.0, %v488
        %490 = vdwg.mxu0
        %v491 = vmul.f32 %v486, 0.25
        %v492 = vmul.f32 %v489, 0.25
        %v493 = vadd.f32 %v491, %v453
        %v494 = vadd.f32 %v492, %v454
        %v495 = vsel %vm455, %v493, -inf
        %496 = vmax.xlane.f32.xlu0 %v495
        %v497 = vpop.xlane.xlu0 %496
        %v498 = vsel %vm455, %v494, -inf
        %499 = vmax.xlane.f32.xlu0 %v498
        %v500 = vpop.xlane.xlu0 %499
        %v501 = vsub.f32 %v493, %v497
        %v502 = vsub.f32 %v494, %v500
        %v503 = vmul.f32 %v501, 1.442695
        %v504 = vpow.pop %v503
        %v505 = vmul.f32 %v502, 1.442695
        %v506 = vpow.pop %v505
        %v507 = vsel %vm455, %v504, 0.0
        %508 = vadd.xlane.f32.xlu0 %v507
        %v509 = vpop.xlane.xlu0 %508
        %v510 = vsel %vm455, %v506, 0.0
        %511 = vadd.xlane.f32.xlu0 %v510
        %v512 = vpop.xlane.xlu0 %511
        %v513 = vrcp.pop %v509
        %v514 = vrcp.pop %v512
        %v515 = vmul.f32 %v504, %v513
        %v516 = vmul.f32 %v506, %v514
        %517 = vrot.lane.b32.xlu0 %v423, 64
        %v518 = vpop.permute.xlu0 %517
        %519 = vrot.lane.b32.xlu0 %v426, 64
        %v520 = vpop.permute.xlu0 %519
        %v524 = vsel %vm455, %v515, 0
        %v527 = vsel %vm455, %v516, 0
        %529 = vmatpush.msra.mxu0 0.0
        %530 = vmatpush.msra.mxu0 0.0
        %531 = vmatpush.msra.mxu0 0.0
        %532 = vmatpush.msra.mxu0 0.0
        %533 = vmatpush.msra.mxu0 0.0
        %534 = vmatpush.msra.mxu0 0.0
        %535 = vmatpush.msra.mxu0 0.0
        %536 = vmatpush.msra.mxu0 0.0
        %537 = vmatpush.msra.mxu0 0.0
        %538 = vmatpush.msra.mxu0 0.0
        %539 = vmatpush.msra.mxu0 0.0
        %540 = vmatpush.msra.mxu0 0.0
        %541 = vmatpush.msra.mxu0 0.0
        %542 = vmatpush.msra.mxu0 0.0
        %543 = vmatpush.msra.mxu0 %v520
        %544 = vmatpush.msra.mxu0 %v518
        %545 = vmatmul.f32.gmra.mxu0 %v524
        %v546 = vpop.f32.mrf.mxu0
        %v547 = vadd.f32 0.0, %v546
        %548 = vmatmul.f32.gmra.mxu0 %v527
        %v549 = vpop.f32.mrf.mxu0
        %v550 = vadd.f32 0.0, %v549
        %551 = vdwg.mxu0
        %552 = vrot.lane.b32.xlu0 %v446, 112
        %v553 = vpop.permute.xlu0 %552
        %554 = vrot.lane.b32.xlu0 %v449, 112
        %v555 = vpop.permute.xlu0 %554
        %556 = vrot.lane.b32.xlu0 %v423, 112
        %v557 = vpop.permute.xlu0 %556
        %558 = vrot.lane.b32.xlu0 %v426, 112
        %v559 = vpop.permute.xlu0 %558
        %v560 = vsel %vm455, %v553, 0
        %v562 = vsel %vm455, %v555, 0
        %v564 = vsel %vm455, %v557, 0
        %v566 = vsel %vm455, %v559, 0
        %568 = vmatpush.xpose.msra.mxu0 0.0
        %569 = vmatpush.xpose.msra.mxu0 0.0
        %570 = vmatpush.xpose.msra.mxu0 0.0
        %571 = vmatpush.xpose.msra.mxu0 0.0
        %572 = vmatpush.xpose.msra.mxu0 0.0
        %573 = vmatpush.xpose.msra.mxu0 0.0
        %574 = vmatpush.xpose.msra.mxu0 0.0
        %575 = vmatpush.xpose.msra.mxu0 0.0
        %576 = vmatpush.xpose.msra.mxu0 0.0
        %577 = vmatpush.xpose.msra.mxu0 0.0
        %578 = vmatpush.xpose.msra.mxu0 0.0
        %579 = vmatpush.xpose.msra.mxu0 0.0
        %580 = vmatpush.xpose.msra.mxu0 0.0
        %581 = vmatpush.xpose.msra.mxu0 0.0
        %582 = vmatpush.xpose.msra.mxu0 %v566
        %583 = vmatpush.xpose.msra.mxu0 %v564
        %584 = vmatmul.f32.gmra.mxu0 %v560
        %v585 = vpop.f32.mrf.mxu0
        %v586 = vadd.f32 0.0, %v585
        %587 = vmatmul.f32.gmra.mxu0 %v562
        %v588 = vpop.f32.mrf.mxu0
        %v589 = vadd.f32 0.0, %v588
        %590 = vdwg.mxu0
        %v591 = vmul.f32 %v586, 0.25
        %v592 = vmul.f32 %v589, 0.25
        %v593 = vadd.f32 %v591, %v453
        %v594 = vadd.f32 %v592, %v454
        %v595 = vsel %vm455, %v593, -inf
        %596 = vmax.xlane.f32.xlu0 %v595
        %v597 = vpop.xlane.xlu0 %596
        %v598 = vsel %vm455, %v594, -inf
        %599 = vmax.xlane.f32.xlu0 %v598
        %v600 = vpop.xlane.xlu0 %599
        %v601 = vsub.f32 %v593, %v597
        %v602 = vsub.f32 %v594, %v600
        %v603 = vmul.f32 %v601, 1.442695
        %v604 = vpow.pop %v603
        %v605 = vmul.f32 %v602, 1.442695
        %v606 = vpow.pop %v605
        %v607 = vsel %vm455, %v604, 0.0
        %608 = vadd.xlane.f32.xlu0 %v607
        %v609 = vpop.xlane.xlu0 %608
        %v610 = vsel %vm455, %v606, 0.0
        %611 = vadd.xlane.f32.xlu0 %v610
        %v612 = vpop.xlane.xlu0 %611
        %v613 = vrcp.pop %v609
        %v614 = vrcp.pop %v612
        %v615 = vmul.f32 %v604, %v613
        %v616 = vmul.f32 %v606, %v614
        %617 = vrot.lane.b32.xlu0 %v423, 48
        %v618 = vpop.permute.xlu0 %617
        %619 = vrot.lane.b32.xlu0 %v426, 48
        %v620 = vpop.permute.xlu0 %619
        %v624 = vsel %vm455, %v615, 0
        %v627 = vsel %vm455, %v616, 0
        %629 = vmatpush.msra.mxu0 0.0
        %630 = vmatpush.msra.mxu0 0.0
        %631 = vmatpush.msra.mxu0 0.0
        %632 = vmatpush.msra.mxu0 0.0
        %633 = vmatpush.msra.mxu0 0.0
        %634 = vmatpush.msra.mxu0 0.0
        %635 = vmatpush.msra.mxu0 0.0
        %636 = vmatpush.msra.mxu0 0.0
        %637 = vmatpush.msra.mxu0 0.0
        %638 = vmatpush.msra.mxu0 0.0
        %639 = vmatpush.msra.mxu0 0.0
        %640 = vmatpush.msra.mxu0 0.0
        %641 = vmatpush.msra.mxu0 0.0
        %642 = vmatpush.msra.mxu0 0.0
        %643 = vmatpush.msra.mxu0 %v620
        %644 = vmatpush.msra.mxu0 %v618
        %645 = vmatmul.f32.gmra.mxu0 %v624
        %v646 = vpop.f32.mrf.mxu0
        %v647 = vadd.f32 0.0, %v646
        %648 = vmatmul.f32.gmra.mxu0 %v627
        %v649 = vpop.f32.mrf.mxu0
        %v650 = vadd.f32 0.0, %v649
        %651 = vdwg.mxu0
        %652 = vrot.lane.b32.xlu0 %v446, 96
        %v653 = vpop.permute.xlu0 %652
        %654 = vrot.lane.b32.xlu0 %v449, 96
        %v655 = vpop.permute.xlu0 %654
        %656 = vrot.lane.b32.xlu0 %v423, 96
        %v657 = vpop.permute.xlu0 %656
        %658 = vrot.lane.b32.xlu0 %v426, 96
        %v659 = vpop.permute.xlu0 %658
        %v660 = vsel %vm455, %v653, 0
        %v662 = vsel %vm455, %v655, 0
        %v664 = vsel %vm455, %v657, 0
        %v666 = vsel %vm455, %v659, 0
        %668 = vmatpush.xpose.msra.mxu0 0.0
        %669 = vmatpush.xpose.msra.mxu0 0.0
        %670 = vmatpush.xpose.msra.mxu0 0.0
        %671 = vmatpush.xpose.msra.mxu0 0.0
        %672 = vmatpush.xpose.msra.mxu0 0.0
        %673 = vmatpush.xpose.msra.mxu0 0.0
        %674 = vmatpush.xpose.msra.mxu0 0.0
        %675 = vmatpush.xpose.msra.mxu0 0.0
        %676 = vmatpush.xpose.msra.mxu0 0.0
        %677 = vmatpush.xpose.msra.mxu0 0.0
        %678 = vmatpush.xpose.msra.mxu0 0.0
        %679 = vmatpush.xpose.msra.mxu0 0.0
        %680 = vmatpush.xpose.msra.mxu0 0.0
        %681 = vmatpush.xpose.msra.mxu0 0.0
        %682 = vmatpush.xpose.msra.mxu0 %v666
        %683 = vmatpush.xpose.msra.mxu0 %v664
        %684 = vmatmul.f32.gmra.mxu0 %v660
        %v685 = vpop.f32.mrf.mxu0
        %v686 = vadd.f32 0.0, %v685
        %687 = vmatmul.f32.gmra.mxu0 %v662
        %v688 = vpop.f32.mrf.mxu0
        %v689 = vadd.f32 0.0, %v688
        %690 = vdwg.mxu0
        %v691 = vmul.f32 %v686, 0.25
        %v692 = vmul.f32 %v689, 0.25
        %v693 = vadd.f32 %v691, %v453
        %v694 = vadd.f32 %v692, %v454
        %v695 = vsel %vm455, %v693, -inf
        %696 = vmax.xlane.f32.xlu0 %v695
        %v697 = vpop.xlane.xlu0 %696
        %v698 = vsel %vm455, %v694, -inf
        %699 = vmax.xlane.f32.xlu0 %v698
        %v700 = vpop.xlane.xlu0 %699
        %v701 = vsub.f32 %v693, %v697
        %v702 = vsub.f32 %v694, %v700
        %v703 = vmul.f32 %v701, 1.442695
        %v704 = vpow.pop %v703
        %v705 = vmul.f32 %v702, 1.442695
        %v706 = vpow.pop %v705
        %v707 = vsel %vm455, %v704, 0.0
        %708 = vadd.xlane.f32.xlu0 %v707
        %v709 = vpop.xlane.xlu0 %708
        %v710 = vsel %vm455, %v706, 0.0
        %711 = vadd.xlane.f32.xlu0 %v710
        %v712 = vpop.xlane.xlu0 %711
        %v713 = vrcp.pop %v709
        %v714 = vrcp.pop %v712
        %v715 = vmul.f32 %v704, %v713
        %v716 = vmul.f32 %v706, %v714
        %717 = vrot.lane.b32.xlu0 %v423, 32
        %v718 = vpop.permute.xlu0 %717
        %719 = vrot.lane.b32.xlu0 %v426, 32
        %v720 = vpop.permute.xlu0 %719
        %v724 = vsel %vm455, %v715, 0
        %v727 = vsel %vm455, %v716, 0
        %729 = vmatpush.msra.mxu0 0.0
        %730 = vmatpush.msra.mxu0 0.0
        %731 = vmatpush.msra.mxu0 0.0
        %732 = vmatpush.msra.mxu0 0.0
        %733 = vmatpush.msra.mxu0 0.0
        %734 = vmatpush.msra.mxu0 0.0
        %735 = vmatpush.msra.mxu0 0.0
        %736 = vmatpush.msra.mxu0 0.0
        %737 = vmatpush.msra.mxu0 0.0
        %738 = vmatpush.msra.mxu0 0.0
        %739 = vmatpush.msra.mxu0 0.0
        %740 = vmatpush.msra.mxu0 0.0
        %741 = vmatpush.msra.mxu0 0.0
        %742 = vmatpush.msra.mxu0 0.0
        %743 = vmatpush.msra.mxu0 %v720
        %744 = vmatpush.msra.mxu0 %v718
        %745 = vmatmul.f32.gmra.mxu0 %v724
        %v746 = vpop.f32.mrf.mxu0
        %v747 = vadd.f32 0.0, %v746
        %748 = vmatmul.f32.gmra.mxu0 %v727
        %v749 = vpop.f32.mrf.mxu0
        %v750 = vadd.f32 0.0, %v749
        %751 = vdwg.mxu0
        %752 = vrot.lane.b32.xlu0 %v446, 80
        %v753 = vpop.permute.xlu0 %752
        %754 = vrot.lane.b32.xlu0 %v449, 80
        %v755 = vpop.permute.xlu0 %754
        %756 = vrot.lane.b32.xlu0 %v423, 80
        %v757 = vpop.permute.xlu0 %756
        %758 = vrot.lane.b32.xlu0 %v426, 80
        %v759 = vpop.permute.xlu0 %758
        %v760 = vsel %vm455, %v753, 0
        %v762 = vsel %vm455, %v755, 0
        %v764 = vsel %vm455, %v757, 0
        %v766 = vsel %vm455, %v759, 0
        %768 = vmatpush.xpose.msra.mxu0 0.0
        %769 = vmatpush.xpose.msra.mxu0 0.0
        %770 = vmatpush.xpose.msra.mxu0 0.0
        %771 = vmatpush.xpose.msra.mxu0 0.0
        %772 = vmatpush.xpose.msra.mxu0 0.0
        %773 = vmatpush.xpose.msra.mxu0 0.0
        %774 = vmatpush.xpose.msra.mxu0 0.0
        %775 = vmatpush.xpose.msra.mxu0 0.0
        %776 = vmatpush.xpose.msra.mxu0 0.0
        %777 = vmatpush.xpose.msra.mxu0 0.0
        %778 = vmatpush.xpose.msra.mxu0 0.0
        %779 = vmatpush.xpose.msra.mxu0 0.0
        %780 = vmatpush.xpose.msra.mxu0 0.0
        %781 = vmatpush.xpose.msra.mxu0 0.0
        %782 = vmatpush.xpose.msra.mxu0 %v766
        %783 = vmatpush.xpose.msra.mxu0 %v764
        %784 = vmatmul.f32.gmra.mxu0 %v760
        %v785 = vpop.f32.mrf.mxu0
        %v786 = vadd.f32 0.0, %v785
        %787 = vmatmul.f32.gmra.mxu0 %v762
        %v788 = vpop.f32.mrf.mxu0
        %v789 = vadd.f32 0.0, %v788
        %790 = vdwg.mxu0
        %v791 = vmul.f32 %v786, 0.25
        %v792 = vmul.f32 %v789, 0.25
        %v793 = vadd.f32 %v791, %v453
        %v794 = vadd.f32 %v792, %v454
        %v795 = vsel %vm455, %v793, -inf
        %796 = vmax.xlane.f32.xlu0 %v795
        %v797 = vpop.xlane.xlu0 %796
        %v798 = vsel %vm455, %v794, -inf
        %799 = vmax.xlane.f32.xlu0 %v798
        %v800 = vpop.xlane.xlu0 %799
        %v801 = vsub.f32 %v793, %v797
        %v802 = vsub.f32 %v794, %v800
        %v803 = vmul.f32 %v801, 1.442695
        %v804 = vpow.pop %v803
        %v805 = vmul.f32 %v802, 1.442695
        %v806 = vpow.pop %v805
        %v807 = vsel %vm455, %v804, 0.0
        %808 = vadd.xlane.f32.xlu0 %v807
        %v809 = vpop.xlane.xlu0 %808
        %v810 = vsel %vm455, %v806, 0.0
        %811 = vadd.xlane.f32.xlu0 %v810
        %v812 = vpop.xlane.xlu0 %811
        %v813 = vrcp.pop %v809
        %v814 = vrcp.pop %v812
        %v815 = vmul.f32 %v804, %v813
        %v816 = vmul.f32 %v806, %v814
        %817 = vrot.lane.b32.xlu0 %v423, 16
        %v818 = vpop.permute.xlu0 %817
        %819 = vrot.lane.b32.xlu0 %v426, 16
        %v820 = vpop.permute.xlu0 %819
        %v824 = vsel %vm455, %v815, 0
        %v827 = vsel %vm455, %v816, 0
        %829 = vmatpush.msra.mxu0 0.0
        %830 = vmatpush.msra.mxu0 0.0
        %831 = vmatpush.msra.mxu0 0.0
        %832 = vmatpush.msra.mxu0 0.0
        %833 = vmatpush.msra.mxu0 0.0
        %834 = vmatpush.msra.mxu0 0.0
        %835 = vmatpush.msra.mxu0 0.0
        %836 = vmatpush.msra.mxu0 0.0
        %837 = vmatpush.msra.mxu0 0.0
        %838 = vmatpush.msra.mxu0 0.0
        %839 = vmatpush.msra.mxu0 0.0
        %840 = vmatpush.msra.mxu0 0.0
        %841 = vmatpush.msra.mxu0 0.0
        %842 = vmatpush.msra.mxu0 0.0
        %843 = vmatpush.msra.mxu0 %v820
        %844 = vmatpush.msra.mxu0 %v818
        %845 = vmatmul.f32.gmra.mxu0 %v824
        %v846 = vpop.f32.mrf.mxu0
        %v847 = vadd.f32 0.0, %v846
        %848 = vmatmul.f32.gmra.mxu0 %v827
        %v849 = vpop.f32.mrf.mxu0
        %v850 = vadd.f32 0.0, %v849
        %851 = vdwg.mxu0
        %854 = vrot.lane.b32.xlu0 %v647, 16
        %v855 = vpop.permute.xlu0 %854
        %856 = vrot.lane.b32.xlu0 %v650, 16
        %v857 = vpop.permute.xlu0 %856
        %862 = vrot.lane.b32.xlu0 %v747, 32
        %v863 = vpop.permute.xlu0 %862
        %864 = vrot.lane.b32.xlu0 %v750, 32
        %v865 = vpop.permute.xlu0 %864
        %870 = vrot.lane.b32.xlu0 %v847, 48
        %v871 = vpop.permute.xlu0 %870
        %872 = vrot.lane.b32.xlu0 %v850, 48
        %v873 = vpop.permute.xlu0 %872
        %v876 = vsel %vm455, %v547, %v855
        %v877 = vsel %vm455, %v550, %v857
        %vm878 = vcmask 261120
        %v879 = vsel %vm878, %v876, %v863
        %v880 = vsel %vm878, %v877, %v865
        %vm881 = vcmask 392192
        %v882 = vsel %vm881, %v879, %v871
        %v883 = vsel %vm881, %v880, %v873
        %v884 = vld [vmem:[#allocation8] sm:$0xff]
        %v885 = vld [vmem:[#allocation8 + $0x8] sm:$0xff]
        %v886 = vld [vmem:[#allocation8 + $0x10] sm:$0xff]
        %v887 = vld [vmem:[#allocation8 + $0x18] sm:$0xff]
        %v888 = vld [vmem:[#allocation8 + $0x20] sm:$0xff]
        %v889 = vld [vmem:[#allocation8 + $0x28] sm:$0xff]
        %v890 = vld [vmem:[#allocation8 + $0x30] sm:$0xff]
        %v891 = vld [vmem:[#allocation8 + $0x38] sm:$0xff]
        %v892 = vld [vmem:[%s4] sm:$0x1]
        %v894 = vperm.slane %v892, 0
        %v897 = vsel %vm398, %v882, 0
        %v900 = vsel %vm398, %v883, 0
        %902 = vmatpush.msra.mxu0 0.0
        %903 = vmatpush.msra.mxu0 0.0
        %904 = vmatpush.msra.mxu0 0.0
        %905 = vmatpush.msra.mxu0 0.0
        %906 = vmatpush.msra.mxu0 0.0
        %907 = vmatpush.msra.mxu0 0.0
        %908 = vmatpush.msra.mxu0 0.0
        %909 = vmatpush.msra.mxu0 0.0
        %910 = vmatpush.msra.mxu0 %v891
        %911 = vmatpush.msra.mxu0 %v890
        %912 = vmatpush.msra.mxu0 %v889
        %913 = vmatpush.msra.mxu0 %v888
        %914 = vmatpush.msra.mxu0 %v887
        %915 = vmatpush.msra.mxu0 %v886
        %916 = vmatpush.msra.mxu0 %v885
        %917 = vmatpush.msra.mxu0 %v884
        %918 = vmatmul.f32.gmra.mxu0 %v897
        %v919 = vpop.f32.mrf.mxu0
        %v920 = vadd.f32 %v894, %v919
        %921 = vmatmul.f32.gmra.mxu0 %v900
        %v922 = vpop.f32.mrf.mxu0
        %v923 = vadd.f32 %v894, %v922
        %924 = vdwg.mxu0
        %925 = vst.msk [vmem:[%s366] sm:$0xff] %vm398, %v920
        %926 = vst.msk [vmem:[%s366 + $0x8] sm:$0xff] %vm398, %v923
        %s927 = sand.u32 %s169, 1
        %s928 = scalar_lea.sflag [#allocation4], %s927
        %s929 = sand.u32 %s169, 1
        %s930 = smul.addr %s929, 16
        %s931 = scalar_lea.vmem [#allocation11], %s930
        %s932 = sand.u32 %s195, 1
        %s933 = scalar_lea.sflag [#allocation13], %s932
        %s934 = sand.u32 %s195, 1
        %s935 = smul.addr %s934, 16
        %s936 = scalar_lea.vmem [#allocation12], %s935
        // Predicated region
        $region65: #{tpu_custom_call.1} parent=43 // pred_check
          %p937 = pneg %p179
        $region66: #{tpu_custom_call.1} parent=43 // pred_check_branch
          %939 = sbr.rel (%p937) target = $region68
        $region67: #{tpu_custom_call.1} parent=43 // pred_region
          %941 = vsyncadd %s928, 0
          %s942 = smul.addr %s30, 2
          %s943 = smul.addr %s942, 8
          %s944 = scalar_lea.hbm %s6, %s943
          %s945 = sshll.u32 %s931, 4
          %s946 = int_to_ptr.vmem [resolvable:$true] %s945
          %s947 = sshll.u32 %s944, 4
          %s948 = int_to_ptr.hbm [resolvable:$true] %s947
          %953 = dma.vmem_to_hbm [thread:$0]  %s946, 256, %s948, %s928, 128, 128, 8
        $region68: #{tpu_custom_call.1} parent=43 // pred_fallthru
          _
        // Predicated region
        $region69: #{tpu_custom_call.1} parent=43 // pred_check
          %p954 = pneg %p205
        $region70: #{tpu_custom_call.1} parent=43 // pred_check_branch
          %956 = sbr.rel (%p954) target = $region72
        $region71: #{tpu_custom_call.1} parent=43 // pred_region
          %958 = vsyncadd %s933, 0
          %s959 = smul.addr %s30, 2
          %s960 = smul.addr %s959, 8
          %s961 = scalar_lea.hbm %s7, %s960
          %s962 = sshll.u32 %s936, 4
          %s963 = int_to_ptr.vmem [resolvable:$true] %s962
          %s964 = sshll.u32 %s961, 4
          %s965 = int_to_ptr.hbm [resolvable:$true] %s964
          %970 = dma.vmem_to_hbm [thread:$0]  %s963, 256, %s965, %s933, 128, 128, 8
        $region72: #{tpu_custom_call.1} parent=43 // pred_fallthru
          _
      $region44: #{tpu_custom_call.1} parent=5 // pred_fallthru
        _
      %p971 = scmp.le.s32.totalorder 2, %s25
      // Predicated region
      $region73: #{tpu_custom_call.1} parent=5 // pred_check
        %p972 = pneg %p971
      $region74: #{tpu_custom_call.1} parent=5 // pred_check_branch
        %974 = sbr.rel (%p972) target = $region76
      $region75: #{tpu_custom_call.1} parent=5 // pred_region
        %s975 = ssub.s32 %s25, 2
        // Predicated region
        $region77: #{tpu_custom_call.1} parent=75 // pred_check
          %p976 = pneg %p185
        $region78: #{tpu_custom_call.1} parent=75 // pred_check_branch
          %978 = sbr.rel (%p976) target = $region80
        $region79: #{tpu_custom_call.1} parent=75 // pred_region
          %s979 = sand.u32 %s170, 1
          %s980 = scalar_lea.sflag [#allocation4], %s979
          %s981 = sand.u32 %s170, 1
          %s982 = smul.addr %s981, 16
          %s983 = scalar_lea.vmem [#allocation11], %s982
          %985 = dma.done %s980, 256
        $region80: #{tpu_custom_call.1} parent=75 // pred_fallthru
          _
        // Predicated region
        $region81: #{tpu_custom_call.1} parent=75 // pred_check
          %p986 = pneg %p211
        $region82: #{tpu_custom_call.1} parent=75 // pred_check_branch
          %988 = sbr.rel (%p986) target = $region84
        $region83: #{tpu_custom_call.1} parent=75 // pred_region
          %s989 = sand.u32 %s196, 1
          %s990 = scalar_lea.sflag [#allocation13], %s989
          %s991 = sand.u32 %s196, 1
          %s992 = smul.addr %s991, 16
          %s993 = scalar_lea.vmem [#allocation12], %s992
          %995 = dma.done %s990, 256
        $region84: #{tpu_custom_call.1} parent=75 // pred_fallthru
          _
      $region76: #{tpu_custom_call.1} parent=5 // pred_fallthru
        _
    $region6: #{tpu_custom_call.1} parent=1 // loop_footer
      %s29 = sadd.s32 1, %s25
    $region7: #{tpu_custom_call.1} parent=1 // loop_footer_branch
      %24 = sbr.rel target = $region3
    $region8: #{tpu_custom_call.1} parent=1 // loop_exit
      _
    %996 = vsyncpa [#allocation3], 1
    %s997 = scalar_lea.sflag [#allocation3], 1
    %998 = vsyncpa %s997, 1
    %999 = vsyncpa [#allocation6], 1
    %1000 = vsyncpa [#allocation9], 1
    %1001 = vsyncpa [#allocation4], 1
    %s1002 = scalar_lea.sflag [#allocation4], 1
    %1003 = vsyncpa %s1002, 1
    %1004 = vsyncpa [#allocation13], 1
    %s1005 = scalar_lea.sflag [#allocation13], 1
    %1006 = vsyncpa %s1005, 1

</llo_original>
